<compile_context>
chip_gen: v5e
topology: v5e:2x2
jax: 0.10.0
libtpu: 0.0.40
codegen_flags: <defaults>
</compile_context>

<pallas_src>
import jax
import jax.numpy as jnp
from jax import lax
from jax.experimental import pallas as pl
from jax.experimental.pallas import tpu as pltpu


def _product_kernel(params_ref, x1_ref, x2_ref, sq1c_ref, sq2c_ref, o_ref):
    # params_ref: SMEM (2,) f32 -> [inv_ls2 (= 1/ls^2), var_prod (= se_var * lin_var)]
    inv_ls2 = params_ref[0]
    var_prod = params_ref[1]

    x1 = x1_ref[...]            # (tm, D) f32
    x2 = x2_ref[...]            # (tn, D) f32

    # <x1_i, x2_j> on the MXU, contracting the shared last axis (no transpose copy).
    inner = lax.dot_general(
        x1, x2,
        dimension_numbers=(((1,), (1,)), ((), ())),
        preferred_element_type=jnp.float32,
    )                            # (tm, tn)

    # With c = -0.5/ls^2 and sq*c = c*||.||^2 pre-scaled in the wrapper:
    #   c * sqdist = c*||x1||^2 + c*||x2||^2 + inner / ls^2
    # sqdist >= 0 clamp  <=>  arg <= 0 clamp (c < 0).
    arg = jnp.minimum(sq1c_ref[...] + sq2c_ref[...] + inner * inv_ls2, 0.0)

    # SE gram * Linear gram:
    #   (var1 * exp(c*sqdist)) * (var2 * inner) = var_prod * inner * exp(arg)
    o_ref[...] = (var_prod * inner * jnp.exp(arg)).astype(o_ref.dtype)


def _round_up(x, m):
    return ((x + m - 1) // m) * m


def kernel_multiplication(x1, x2, params, *, out_dtype=jnp.float32,
                          vmem_budget_bytes=24 * 1024 * 1024):
    """x1: (N1, D), x2: (N2, D), params: (3,) f32 [ls, se_var, lin_var] -> gram (N1, N2)."""
    N1, D = x1.shape
    N2, D2 = x2.shape
    assert D == D2
    out_itemsize = jnp.dtype(out_dtype).itemsize

    x1 = x1.astype(jnp.float32)
    x2 = x2.astype(jnp.float32)

    # Fold all scalar hyperparameter math once (outside the per-tile path).
    ls, se_var, lin_var = params[0], params[1], params[2]
    c = -0.5 / (ls * ls)                                         # SE exponent scale (< 0)
    folded = jnp.stack([1.0 / (ls * ls), se_var * lin_var]).astype(jnp.float32)

    # Row norms pre-scaled by c: (N1, 1) column and lane-dense (1, N2) slab.
    sq1c = (c * jnp.sum(x1 * x1, axis=-1, keepdims=True)).astype(jnp.float32)   # (N1, 1)
    sq2c = (c * jnp.sum(x2 * x2, axis=-1))[None, :].astype(jnp.float32)         # (1, N2)

    # ---- tile choice ----
    # Column tile: keep all of x2 (and sq2c) resident when small; else lane-aligned 1024 tile.
    if 2 * N2 * (D + 1) * 4 <= 4 * 1024 * 1024:
        tn = N2
    else:
        tn = min(1024, _round_up(N2, 128))
    # Row tile: biggest candidate whose double-buffered output slab + inputs fit the budget.
    tm = 8
    for cand in (2048, 1024, 512, 256, 128, 64, 32, 16, 8):
        vmem = (2 * cand * tn * out_itemsize          # output slab (double-buffered)
                + 2 * cand * (D + 1) * 4              # x1 + sq1c tiles
                + 2 * tn * (D + 1) * 4)               # x2 + sq2c tiles
        if vmem <= vmem_budget_bytes:
            tm = cand
            break
    tm = min(tm, _round_up(N1, 8))

    # Pad so tiles divide evenly; padded rows/cols are sliced off afterwards.
    N1p = _round_up(N1, tm)
    N2p = _round_up(N2, tn)
    if N1p != N1:
        x1 = jnp.pad(x1, ((0, N1p - N1), (0, 0)))
        sq1c = jnp.pad(sq1c, ((0, N1p - N1), (0, 0)))
    if N2p != N2:
        x2 = jnp.pad(x2, ((0, N2p - N2), (0, 0)))
        sq2c = jnp.pad(sq2c, ((0, 0), (0, N2p - N2)))

    grid = (N1p // tm, N2p // tn)   # second axis collapses to 1 when x2 is fully resident

    out = pl.pallas_call(
        _product_kernel,
        out_shape=jax.ShapeDtypeStruct((N1p, N2p), out_dtype),
        grid_spec=pltpu.PrefetchScalarGridSpec(
            num_scalar_prefetch=0,
            grid=grid,
            in_specs=[
                pl.BlockSpec(memory_space=pltpu.MemorySpace.SMEM),    # folded scalar params
                pl.BlockSpec((tm, D), lambda i, j: (i, 0)),           # x1 row tile
                pl.BlockSpec((tn, D), lambda i, j: (j, 0)),           # x2 (resident when tn==N2p)
                pl.BlockSpec((tm, 1), lambda i, j: (i, 0)),           # c*||x1||^2 column
                pl.BlockSpec((1, tn), lambda i, j: (0, j)),           # c*||x2||^2 lane-dense row
            ],
            out_specs=pl.BlockSpec((tm, tn), lambda i, j: (i, j)),    # lane-dense Gram slab
        ),
        compiler_params=pltpu.CompilerParams(
            dimension_semantics=("parallel", "parallel"),
            vmem_limit_bytes=32 * 1024 * 1024,
        ),
    )(folded, x1, x2, sq1c, sq2c)

    return out[:N1, :N2]


def _softplus(x):
    return jnp.logaddexp(x, 0.0)


def params_from_embedding(kernel_embedding, w_se, w_lin):
    """Glue (STANDARD eval mode): embedding -> positive kernel hyperparameters."""
    raw_se = kernel_embedding @ w_se          # (2,): raw lengthscale, raw variance
    raw_lin = kernel_embedding @ w_lin        # (1,): raw variance
    se_ls = _softplus(raw_se[0]) + 1e-3
    se_var = _softplus(raw_se[1]) + 1e-3
    lin_var = _softplus(raw_lin[0]) + 1e-3
    return jnp.stack([se_ls, se_var, lin_var]).astype(jnp.float32)


def reference(x1, x2, params):
    ls, se_var, lin_var = params[0], params[1], params[2]
    inner = x1 @ x2.T
    sqdist = jnp.maximum(
        jnp.sum(x1 * x1, -1)[:, None] + jnp.sum(x2 * x2, -1)[None, :] - 2.0 * inner,
        0.0,
    )
    k_se = se_var * jnp.exp(-0.5 * sqdist / (ls * ls))
    k_lin = lin_var * inner
    return k_se * k_lin


if __name__ == "__main__":
    key = jax.random.PRNGKey(0)
    k1, k2, k3, k4, k5 = jax.random.split(key, 5)

    D, E = 8, 16                          # feature dim, embedding dim

    kernel_embedding = jax.random.normal(k3, (E,), dtype=jnp.float32)
    # deterministic parameter-head weights (embedding -> kernel hyperparams)
    w_se = 0.1 * jax.random.normal(k4, (E, 2), dtype=jnp.float32)
    w_lin = 0.1 * jax.random.normal(k5, (E, 1), dtype=jnp.float32)
    params = params_from_embedding(kernel_embedding, w_se, w_lin)

    # Case 1: aligned shapes (fully-resident x2, single lane-dense output slab).
    N1, N2 = 256, 256
    x1 = jax.random.normal(k1, (N1, D), dtype=jnp.float32)
    x2 = jax.random.normal(k2, (N2, D), dtype=jnp.float32)
    gram = jax.block_until_ready(kernel_multiplication(x1, x2, params))
    assert gram.shape == (N1, N2)
    assert jnp.allclose(gram, reference(x1, x2, params), rtol=1e-5, atol=1e-5)

    # Case 2: ragged shapes (exercises padding / slice-off path).
    N1b, N2b = 200, 136
    x1b = x1[:N1b]
    x2b = x2[:N2b]
    gram_b = jax.block_until_ready(kernel_multiplication(x1b, x2b, params))
    assert gram_b.shape == (N1b, N2b)
    assert jnp.allclose(gram_b, reference(x1b, x2b, params), rtol=1e-5, atol=1e-5)

    print("KERNEL_OK")
</pallas_src>

<mosaic_0001>
module attributes {stable_mosaic.version = 11 : i64} {
  func.func @_product_kernel(%arg0: i32, %arg1: i32, %arg2: memref<2xf32, #tpu.memory_space<smem>>, %arg3: memref<256x8xf32, #tpu.memory_space<vmem>>, %arg4: memref<256x8xf32, #tpu.memory_space<vmem>>, %arg5: memref<256x1xf32, #tpu.memory_space<vmem>>, %arg6: memref<1x256xf32, #tpu.memory_space<vmem>>, %arg7: memref<256x256xf32, #tpu.memory_space<vmem>>) attributes {dimension_semantics = [#tpu.dimension_semantics<parallel>, #tpu.dimension_semantics<parallel>], iteration_bounds = array<i64: 1, 1>, scalar_prefetch = 0 : i64, scratch_operands = 0 : i64, tpu.core_type = #tpu.core_type<tc>, window_params = [{transform_indices = @transform_0, window_bounds = array<i64: 2>}, {transform_indices = @transform_1, window_bounds = array<i64: 256, 8>}, {transform_indices = @transform_2, window_bounds = array<i64: 256, 8>}, {transform_indices = @transform_3, window_bounds = array<i64: 256, 1>}, {transform_indices = @transform_4, window_bounds = array<i64: 1, 256>}, {transform_indices = @transform_5, window_bounds = array<i64: 256, 256>}]} {
    %c0 = arith.constant 0 : index
    %0 = memref.load %arg2[%c0] : memref<2xf32, #tpu.memory_space<smem>>
    %c1 = arith.constant 1 : index
    %1 = memref.load %arg2[%c1] : memref<2xf32, #tpu.memory_space<smem>>
    %c0_0 = arith.constant 0 : index
    %c0_1 = arith.constant 0 : index
    %2 = vector.load %arg3[%c0_0, %c0_1] : memref<256x8xf32, #tpu.memory_space<vmem>>, vector<256x8xf32>
    %c0_2 = arith.constant 0 : index
    %c0_3 = arith.constant 0 : index
    %3 = vector.load %arg4[%c0_2, %c0_3] : memref<256x8xf32, #tpu.memory_space<vmem>>, vector<256x8xf32>
    %cst = arith.constant dense<0.000000e+00> : vector<256x256xf32>
    %4 = tpu.matmul %2, %3, %cst {dimension_numbers = #tpu.dot_dimension_numbers<[1], [1], [0], [0], [0, 0, 1, 0], [], []>} : vector<256x8xf32>, vector<256x8xf32>, vector<256x256xf32> -> vector<256x256xf32>
    %c0_4 = arith.constant 0 : index
    %c0_5 = arith.constant 0 : index
    %5 = vector.load %arg5[%c0_4, %c0_5] : memref<256x1xf32, #tpu.memory_space<vmem>>, vector<256x1xf32>
    %c0_6 = arith.constant 0 : index
    %c0_7 = arith.constant 0 : index
    %6 = vector.load %arg6[%c0_6, %c0_7] : memref<1x256xf32, #tpu.memory_space<vmem>>, vector<1x256xf32>
    %7 = vector.broadcast %5 : vector<256x1xf32> to vector<256x256xf32>
    %8 = vector.broadcast %6 : vector<1x256xf32> to vector<256x256xf32>
    %9 = arith.addf %7, %8 : vector<256x256xf32>
    %10 = vector.broadcast %0 : f32 to vector<256x256xf32>
    %11 = arith.mulf %4, %10 : vector<256x256xf32>
    %12 = arith.addf %9, %11 : vector<256x256xf32>
    %cst_8 = arith.constant 0.000000e+00 : f32
    %13 = vector.broadcast %cst_8 : f32 to vector<256x256xf32>
    %14 = arith.minimumf %12, %13 : vector<256x256xf32>
    %15 = vector.broadcast %1 : f32 to vector<256x256xf32>
    %16 = arith.mulf %15, %4 : vector<256x256xf32>
    %17 = math.exp %14 : vector<256x256xf32>
    %18 = arith.mulf %16, %17 : vector<256x256xf32>
    %c0_9 = arith.constant 0 : index
    %c0_10 = arith.constant 0 : index
    %19 = vector.load %arg7[%c0_9, %c0_10] : memref<256x256xf32, #tpu.memory_space<vmem>>, vector<256x256xf32>
    tpu.vector_store %arg7[%c0_9, %c0_10], %18 {strides = array<i32>} : memref<256x256xf32, #tpu.memory_space<vmem>>, vector<256x256xf32>,
    return
  }
  func.func @transform_0(%arg0: i32, %arg1: i32) -> i32 {
    %c0_i32 = arith.constant 0 : i32
    %c0_i32_0 = arith.constant 0 : i32
    return %c0_i32 : i32
  }
  func.func @transform_1(%arg0: i32, %arg1: i32) -> (i32, i32) {
    %c0_i32 = arith.constant 0 : i32
    %c0_i32_0 = arith.constant 0 : i32
    return %arg0, %c0_i32 : i32, i32
  }
  func.func @transform_2(%arg0: i32, %arg1: i32) -> (i32, i32) {
    %c0_i32 = arith.constant 0 : i32
    %c0_i32_0 = arith.constant 0 : i32
    return %arg1, %c0_i32 : i32, i32
  }
  func.func @transform_3(%arg0: i32, %arg1: i32) -> (i32, i32) {
    %c0_i32 = arith.constant 0 : i32
    %c0_i32_0 = arith.constant 0 : i32
    return %arg0, %c0_i32 : i32, i32
  }
  func.func @transform_4(%arg0: i32, %arg1: i32) -> (i32, i32) {
    %c0_i32 = arith.constant 0 : i32
    %c0_i32_0 = arith.constant 0 : i32
    return %c0_i32, %arg1 : i32, i32
  }
  func.func @transform_5(%arg0: i32, %arg1: i32) -> (i32, i32) {
    %c0_i32 = arith.constant 0 : i32
    return %arg0, %arg1 : i32, i32
  }
}

</mosaic_0001>

<llo_original>
// kernel: tpu_custom_call.1
$region0: #{tpu_custom_call.1}
  #allocation0 [shape = 'u32[]', space=smem, size = 0x4, offset = 0x4, fixed_abs, tag = 'smem constant byte address 0x4 - core index']
  #allocation1 [shape = 'u32[72,128]{1,0:T(1,128)}', space=vmem, size = 0x9000, scoped, tag = 'internal scratch']
  %s0 = inlined_call_operand.vmem [shape: f32[2], index: 0, kind: input, shape index: {}]
  %s1 = inlined_call_operand.vmem [shape: f32[256,8], index: 1, kind: input, shape index: {}]
  %s2 = inlined_call_operand.vmem [shape: f32[256,8], index: 2, kind: input, shape index: {}]
  %s3 = inlined_call_operand.vmem [shape: f32[256,1], index: 3, kind: input, shape index: {}]
  %s4 = inlined_call_operand.vmem [shape: f32[1,256], index: 4, kind: input, shape index: {}]
  %s5 = inlined_call_operand.hbm [shape: f32[256,256], index: 5, kind: output, shape index: {}]
  %s6 = sld [smem:[#allocation0]]
  $region34: #{tpu_custom_call.1} parent=0
    _
  %s8 = ssub.s32 1, %s6
  %s9 = scalar_select 0, %s8, %s6
  $region1: #{tpu_custom_call.1} parent=0
    #allocation2 [shape = 'u8[512]{0}', space=smem, size = 0x200, scoped, tag = 'input window, operand 0, single buffered']
    #allocation3 [shape = 's32[1]{0}', space=sflag, size = 0x4, scoped, tag = 'scoped memory for tpu_custom_call.1']
    #allocation4 [shape = 's32[1]{0}', space=sflag, size = 0x4, scoped, tag = 'scoped memory for tpu_custom_call.1']
    #allocation5 [shape = 'u8[262144]{0}', space=vmem, size = 0x40000, scoped, tag = 'output window, operand 0, single buffered']
    %10 = vsyncpa [#allocation4], 0
    %11 = vsyncpa [#allocation3], 0
    // Predicated region
    $region2: #{tpu_custom_call.1} parent=1 // pred_check
      _
    $region3: #{tpu_custom_call.1} parent=1 // pred_check_branch
      %13 = sbr.rel (0) target = $region5
    $region4: #{tpu_custom_call.1} parent=1 // pred_region
      %15 = vsyncadd [#allocation4], 0
      %s17 = sshll.u32 %s0, 4
      %s18 = int_to_ptr.vmem [resolvable:$true] %s17
      %20 = dma.vmem_to_smem %s18, 16, [#allocation2], [#allocation4]
    $region5: #{tpu_custom_call.1} parent=1 // pred_fallthru
      _
    // Predicated region
    $region6: #{tpu_custom_call.1} parent=1 // pred_check
      _
    $region7: #{tpu_custom_call.1} parent=1 // pred_check_branch
      %22 = sbr.rel (0) target = $region9
    $region8: #{tpu_custom_call.1} parent=1 // pred_region
      _
    $region9: #{tpu_custom_call.1} parent=1 // pred_fallthru
      _
    // Predicated region
    $region10: #{tpu_custom_call.1} parent=1 // pred_check
      _
    $region11: #{tpu_custom_call.1} parent=1 // pred_check_branch
      %24 = sbr.rel (0) target = $region13
    $region12: #{tpu_custom_call.1} parent=1 // pred_region
      _
    $region13: #{tpu_custom_call.1} parent=1 // pred_fallthru
      _
    // Predicated region
    $region14: #{tpu_custom_call.1} parent=1 // pred_check
      _
    $region15: #{tpu_custom_call.1} parent=1 // pred_check_branch
      %26 = sbr.rel (0) target = $region17
    $region16: #{tpu_custom_call.1} parent=1 // pred_region
      _
    $region17: #{tpu_custom_call.1} parent=1 // pred_fallthru
      _
    // Predicated region
    $region18: #{tpu_custom_call.1} parent=1 // pred_check
      _
    $region19: #{tpu_custom_call.1} parent=1 // pred_check_branch
      %28 = sbr.rel (0) target = $region21
    $region20: #{tpu_custom_call.1} parent=1 // pred_region
      _
    $region21: #{tpu_custom_call.1} parent=1 // pred_fallthru
      _
    // Predicated region
    $region22: #{tpu_custom_call.1} parent=1 // pred_check
      _
    $region23: #{tpu_custom_call.1} parent=1 // pred_check_branch
      %30 = sbr.rel (0) target = $region25
    $region24: #{tpu_custom_call.1} parent=1 // pred_region
      %32 = dma.done [#allocation4], 16
    $region25: #{tpu_custom_call.1} parent=1 // pred_fallthru
      _
    %33 = sfence
    %s34 = sld [smem:[#allocation2]]
    %s35 = sld [smem:[#allocation2 + $0x1]]
    %v36 = vld [vmem:[%s1] sm:$0xff]
    %v37 = vld [vmem:[%s1 + $0x8] sm:$0xff]
    %v38 = vld [vmem:[%s1 + $0x10] sm:$0xff]
    %v39 = vld [vmem:[%s1 + $0x18] sm:$0xff]
    %v40 = vld [vmem:[%s1 + $0x20] sm:$0xff]
    %v41 = vld [vmem:[%s1 + $0x28] sm:$0xff]
    %v42 = vld [vmem:[%s1 + $0x30] sm:$0xff]
    %v43 = vld [vmem:[%s1 + $0x38] sm:$0xff]
    %v44 = vld [vmem:[%s1 + $0x40] sm:$0xff]
    %v45 = vld [vmem:[%s1 + $0x48] sm:$0xff]
    %v46 = vld [vmem:[%s1 + $0x50] sm:$0xff]
    %v47 = vld [vmem:[%s1 + $0x58] sm:$0xff]
    %v48 = vld [vmem:[%s1 + $0x60] sm:$0xff]
    %v49 = vld [vmem:[%s1 + $0x68] sm:$0xff]
    %v50 = vld [vmem:[%s1 + $0x70] sm:$0xff]
    %v51 = vld [vmem:[%s1 + $0x78] sm:$0xff]
    %v52 = vld [vmem:[%s1 + $0x80] sm:$0xff]
    %v53 = vld [vmem:[%s1 + $0x88] sm:$0xff]
    %v54 = vld [vmem:[%s1 + $0x90] sm:$0xff]
    %v55 = vld [vmem:[%s1 + $0x98] sm:$0xff]
    %v56 = vld [vmem:[%s1 + $0xa0] sm:$0xff]
    %v57 = vld [vmem:[%s1 + $0xa8] sm:$0xff]
    %v58 = vld [vmem:[%s1 + $0xb0] sm:$0xff]
    %v59 = vld [vmem:[%s1 + $0xb8] sm:$0xff]
    %v60 = vld [vmem:[%s1 + $0xc0] sm:$0xff]
    %v61 = vld [vmem:[%s1 + $0xc8] sm:$0xff]
    %v62 = vld [vmem:[%s1 + $0xd0] sm:$0xff]
    %v63 = vld [vmem:[%s1 + $0xd8] sm:$0xff]
    %v64 = vld [vmem:[%s1 + $0xe0] sm:$0xff]
    %v65 = vld [vmem:[%s1 + $0xe8] sm:$0xff]
    %v66 = vld [vmem:[%s1 + $0xf0] sm:$0xff]
    %v67 = vld [vmem:[%s1 + $0xf8] sm:$0xff]
    %v68 = vld [vmem:[%s2] sm:$0xff]
    %v69 = vld [vmem:[%s2 + $0x8] sm:$0xff]
    %v70 = vld [vmem:[%s2 + $0x10] sm:$0xff]
    %v71 = vld [vmem:[%s2 + $0x18] sm:$0xff]
    %v72 = vld [vmem:[%s2 + $0x20] sm:$0xff]
    %v73 = vld [vmem:[%s2 + $0x28] sm:$0xff]
    %v74 = vld [vmem:[%s2 + $0x30] sm:$0xff]
    %v75 = vld [vmem:[%s2 + $0x38] sm:$0xff]
    %v76 = vld [vmem:[%s2 + $0x40] sm:$0xff]
    %v77 = vld [vmem:[%s2 + $0x48] sm:$0xff]
    %v78 = vld [vmem:[%s2 + $0x50] sm:$0xff]
    %v79 = vld [vmem:[%s2 + $0x58] sm:$0xff]
    %v80 = vld [vmem:[%s2 + $0x60] sm:$0xff]
    %v81 = vld [vmem:[%s2 + $0x68] sm:$0xff]
    %v82 = vld [vmem:[%s2 + $0x70] sm:$0xff]
    %v83 = vld [vmem:[%s2 + $0x78] sm:$0xff]
    %v84 = vld [vmem:[%s2 + $0x80] sm:$0xff]
    %v85 = vld [vmem:[%s2 + $0x88] sm:$0xff]
    %v86 = vld [vmem:[%s2 + $0x90] sm:$0xff]
    %v87 = vld [vmem:[%s2 + $0x98] sm:$0xff]
    %v88 = vld [vmem:[%s2 + $0xa0] sm:$0xff]
    %v89 = vld [vmem:[%s2 + $0xa8] sm:$0xff]
    %v90 = vld [vmem:[%s2 + $0xb0] sm:$0xff]
    %v91 = vld [vmem:[%s2 + $0xb8] sm:$0xff]
    %v92 = vld [vmem:[%s2 + $0xc0] sm:$0xff]
    %v93 = vld [vmem:[%s2 + $0xc8] sm:$0xff]
    %v94 = vld [vmem:[%s2 + $0xd0] sm:$0xff]
    %v95 = vld [vmem:[%s2 + $0xd8] sm:$0xff]
    %v96 = vld [vmem:[%s2 + $0xe0] sm:$0xff]
    %v97 = vld [vmem:[%s2 + $0xe8] sm:$0xff]
    %v98 = vld [vmem:[%s2 + $0xf0] sm:$0xff]
    %v99 = vld [vmem:[%s2 + $0xf8] sm:$0xff]
    %vm100 = vcmask 64512
    %v102 = vsel %vm100, %v36, 0
    %v105 = vsel %vm100, %v37, 0
    %v108 = vsel %vm100, %v38, 0
    %v111 = vsel %vm100, %v39, 0
    %v114 = vsel %vm100, %v40, 0
    %v117 = vsel %vm100, %v41, 0
    %v120 = vsel %vm100, %v42, 0
    %v123 = vsel %vm100, %v43, 0
    %v126 = vsel %vm100, %v44, 0
    %v129 = vsel %vm100, %v45, 0
    %v132 = vsel %vm100, %v46, 0
    %v135 = vsel %vm100, %v47, 0
    %v138 = vsel %vm100, %v48, 0
    %v141 = vsel %vm100, %v49, 0
    %v144 = vsel %vm100, %v50, 0
    %v147 = vsel %vm100, %v51, 0
    %v150 = vsel %vm100, %v52, 0
    %v153 = vsel %vm100, %v53, 0
    %v156 = vsel %vm100, %v54, 0
    %v159 = vsel %vm100, %v55, 0
    %v162 = vsel %vm100, %v56, 0
    %v165 = vsel %vm100, %v57, 0
    %v168 = vsel %vm100, %v58, 0
    %v171 = vsel %vm100, %v59, 0
    %v174 = vsel %vm100, %v60, 0
    %v177 = vsel %vm100, %v61, 0
    %v180 = vsel %vm100, %v62, 0
    %v183 = vsel %vm100, %v63, 0
    %v186 = vsel %vm100, %v64, 0
    %v189 = vsel %vm100, %v65, 0
    %v192 = vsel %vm100, %v66, 0
    %v195 = vsel %vm100, %v67, 0
    %v198 = vsel %vm100, %v68, 0
    %v201 = vsel %vm100, %v69, 0
    %v204 = vsel %vm100, %v70, 0
    %v207 = vsel %vm100, %v71, 0
    %v210 = vsel %vm100, %v72, 0
    %v213 = vsel %vm100, %v73, 0
    %v216 = vsel %vm100, %v74, 0
    %v219 = vsel %vm100, %v75, 0
    %v222 = vsel %vm100, %v76, 0
    %v225 = vsel %vm100, %v77, 0
    %v228 = vsel %vm100, %v78, 0
    %v231 = vsel %vm100, %v79, 0
    %v234 = vsel %vm100, %v80, 0
    %v237 = vsel %vm100, %v81, 0
    %v240 = vsel %vm100, %v82, 0
    %v243 = vsel %vm100, %v83, 0
    %v246 = vsel %vm100, %v84, 0
    %v249 = vsel %vm100, %v85, 0
    %v252 = vsel %vm100, %v86, 0
    %v255 = vsel %vm100, %v87, 0
    %v258 = vsel %vm100, %v88, 0
    %v261 = vsel %vm100, %v89, 0
    %v264 = vsel %vm100, %v90, 0
    %v267 = vsel %vm100, %v91, 0
    %v270 = vsel %vm100, %v92, 0
    %v273 = vsel %vm100, %v93, 0
    %v276 = vsel %vm100, %v94, 0
    %v279 = vsel %vm100, %v95, 0
    %v282 = vsel %vm100, %v96, 0
    %v285 = vsel %vm100, %v97, 0
    %v288 = vsel %vm100, %v98, 0
    %v291 = vsel %vm100, %v99, 0
    %293 = vmatpush.xpose.msra.mxu0 %v243
    %294 = vmatpush.xpose.msra.mxu0 %v240
    %295 = vmatpush.xpose.msra.mxu0 %v237
    %296 = vmatpush.xpose.msra.mxu0 %v234
    %297 = vmatpush.xpose.msra.mxu0 %v231
    %298 = vmatpush.xpose.msra.mxu0 %v228
    %299 = vmatpush.xpose.msra.mxu0 %v225
    %300 = vmatpush.xpose.msra.mxu0 %v222
    %301 = vmatpush.xpose.msra.mxu0 %v219
    %302 = vmatpush.xpose.msra.mxu0 %v216
    %303 = vmatpush.xpose.msra.mxu0 %v213
    %304 = vmatpush.xpose.msra.mxu0 %v210
    %305 = vmatpush.xpose.msra.mxu0 %v207
    %306 = vmatpush.xpose.msra.mxu0 %v204
    %307 = vmatpush.xpose.msra.mxu0 %v201
    %308 = vmatpush.xpose.msra.mxu0 %v198
    %309 = vmatmul.f32.gmra.mxu0 %v102
    %v310 = vpop.f32.mrf.mxu0
    %v311 = vadd.f32 0.0, %v310
    %312 = vmatmul.f32.gmra.mxu0 %v105
    %v313 = vpop.f32.mrf.mxu0
    %v314 = vadd.f32 0.0, %v313
    %315 = vmatmul.f32.gmra.mxu0 %v108
    %v316 = vpop.f32.mrf.mxu0
    %v317 = vadd.f32 0.0, %v316
    %318 = vmatmul.f32.gmra.mxu0 %v111
    %v319 = vpop.f32.mrf.mxu0
    %v320 = vadd.f32 0.0, %v319
    %321 = vmatmul.f32.gmra.mxu0 %v114
    %v322 = vpop.f32.mrf.mxu0
    %v323 = vadd.f32 0.0, %v322
    %324 = vmatmul.f32.gmra.mxu0 %v117
    %v325 = vpop.f32.mrf.mxu0
    %v326 = vadd.f32 0.0, %v325
    %327 = vmatmul.f32.gmra.mxu0 %v120
    %v328 = vpop.f32.mrf.mxu0
    %v329 = vadd.f32 0.0, %v328
    %330 = vmatmul.f32.gmra.mxu0 %v123
    %v331 = vpop.f32.mrf.mxu0
    %v332 = vadd.f32 0.0, %v331
    %333 = vmatmul.f32.gmra.mxu0 %v126
    %v334 = vpop.f32.mrf.mxu0
    %v335 = vadd.f32 0.0, %v334
    %336 = vmatmul.f32.gmra.mxu0 %v129
    %v337 = vpop.f32.mrf.mxu0
    %v338 = vadd.f32 0.0, %v337
    %339 = vmatmul.f32.gmra.mxu0 %v132
    %v340 = vpop.f32.mrf.mxu0
    %v341 = vadd.f32 0.0, %v340
    %342 = vmatmul.f32.gmra.mxu0 %v135
    %v343 = vpop.f32.mrf.mxu0
    %v344 = vadd.f32 0.0, %v343
    %345 = vmatmul.f32.gmra.mxu0 %v138
    %v346 = vpop.f32.mrf.mxu0
    %v347 = vadd.f32 0.0, %v346
    %348 = vmatmul.f32.gmra.mxu0 %v141
    %v349 = vpop.f32.mrf.mxu0
    %v350 = vadd.f32 0.0, %v349
    %351 = vmatmul.f32.gmra.mxu0 %v144
    %v352 = vpop.f32.mrf.mxu0
    %v353 = vadd.f32 0.0, %v352
    %354 = vmatmul.f32.gmra.mxu0 %v147
    %v355 = vpop.f32.mrf.mxu0
    %v356 = vadd.f32 0.0, %v355
    %357 = vmatmul.f32.gmra.mxu0 %v150
    %v358 = vpop.f32.mrf.mxu0
    %v359 = vadd.f32 0.0, %v358
    %360 = vmatmul.f32.gmra.mxu0 %v153
    %v361 = vpop.f32.mrf.mxu0
    %v362 = vadd.f32 0.0, %v361
    %363 = vmatmul.f32.gmra.mxu0 %v156
    %v364 = vpop.f32.mrf.mxu0
    %v365 = vadd.f32 0.0, %v364
    %366 = vmatmul.f32.gmra.mxu0 %v159
    %v367 = vpop.f32.mrf.mxu0
    %v368 = vadd.f32 0.0, %v367
    %369 = vmatmul.f32.gmra.mxu0 %v162
    %v370 = vpop.f32.mrf.mxu0
    %v371 = vadd.f32 0.0, %v370
    %372 = vmatmul.f32.gmra.mxu0 %v165
    %v373 = vpop.f32.mrf.mxu0
    %v374 = vadd.f32 0.0, %v373
    %375 = vmatmul.f32.gmra.mxu0 %v168
    %v376 = vpop.f32.mrf.mxu0
    %v377 = vadd.f32 0.0, %v376
    %378 = vmatmul.f32.gmra.mxu0 %v171
    %v379 = vpop.f32.mrf.mxu0
    %v380 = vadd.f32 0.0, %v379
    %381 = vmatmul.f32.gmra.mxu0 %v174
    %v382 = vpop.f32.mrf.mxu0
    %v383 = vadd.f32 0.0, %v382
    %384 = vmatmul.f32.gmra.mxu0 %v177
    %v385 = vpop.f32.mrf.mxu0
    %v386 = vadd.f32 0.0, %v385
    %387 = vmatmul.f32.gmra.mxu0 %v180
    %v388 = vpop.f32.mrf.mxu0
    %v389 = vadd.f32 0.0, %v388
    %390 = vmatmul.f32.gmra.mxu0 %v183
    %v391 = vpop.f32.mrf.mxu0
    %v392 = vadd.f32 0.0, %v391
    %393 = vmatmul.f32.gmra.mxu0 %v186
    %v394 = vpop.f32.mrf.mxu0
    %v395 = vadd.f32 0.0, %v394
    %396 = vmatmul.f32.gmra.mxu0 %v189
    %v397 = vpop.f32.mrf.mxu0
    %v398 = vadd.f32 0.0, %v397
    %399 = vmatmul.f32.gmra.mxu0 %v192
    %v400 = vpop.f32.mrf.mxu0
    %v401 = vadd.f32 0.0, %v400
    %402 = vmatmul.f32.gmra.mxu0 %v195
    %v403 = vpop.f32.mrf.mxu0
    %v404 = vadd.f32 0.0, %v403
    %405 = vdwg.mxu0
    %406 = vmatpush.xpose.msra.mxu0 %v291
    %407 = vmatpush.xpose.msra.mxu0 %v288
    %408 = vmatpush.xpose.msra.mxu0 %v285
    %409 = vmatpush.xpose.msra.mxu0 %v282
    %410 = vmatpush.xpose.msra.mxu0 %v279
    %411 = vmatpush.xpose.msra.mxu0 %v276
    %412 = vmatpush.xpose.msra.mxu0 %v273
    %413 = vmatpush.xpose.msra.mxu0 %v270
    %414 = vmatpush.xpose.msra.mxu0 %v267
    %415 = vmatpush.xpose.msra.mxu0 %v264
    %416 = vmatpush.xpose.msra.mxu0 %v261
    %417 = vmatpush.xpose.msra.mxu0 %v258
    %418 = vmatpush.xpose.msra.mxu0 %v255
    %419 = vmatpush.xpose.msra.mxu0 %v252
    %420 = vmatpush.xpose.msra.mxu0 %v249
    %421 = vmatpush.xpose.msra.mxu0 %v246
    %422 = vmatmul.f32.gmra.mxu0 %v102
    %v423 = vpop.f32.mrf.mxu0
    %v424 = vadd.f32 0.0, %v423
    %425 = vmatmul.f32.gmra.mxu0 %v105
    %v426 = vpop.f32.mrf.mxu0
    %v427 = vadd.f32 0.0, %v426
    %428 = vmatmul.f32.gmra.mxu0 %v108
    %v429 = vpop.f32.mrf.mxu0
    %v430 = vadd.f32 0.0, %v429
    %431 = vmatmul.f32.gmra.mxu0 %v111
    %v432 = vpop.f32.mrf.mxu0
    %v433 = vadd.f32 0.0, %v432
    %434 = vmatmul.f32.gmra.mxu0 %v114
    %v435 = vpop.f32.mrf.mxu0
    %v436 = vadd.f32 0.0, %v435
    %437 = vmatmul.f32.gmra.mxu0 %v117
    %v438 = vpop.f32.mrf.mxu0
    %v439 = vadd.f32 0.0, %v438
    %440 = vmatmul.f32.gmra.mxu0 %v120
    %v441 = vpop.f32.mrf.mxu0
    %v442 = vadd.f32 0.0, %v441
    %443 = vmatmul.f32.gmra.mxu0 %v123
    %v444 = vpop.f32.mrf.mxu0
    %v445 = vadd.f32 0.0, %v444
    %446 = vmatmul.f32.gmra.mxu0 %v126
    %v447 = vpop.f32.mrf.mxu0
    %v448 = vadd.f32 0.0, %v447
    %449 = vmatmul.f32.gmra.mxu0 %v129
    %v450 = vpop.f32.mrf.mxu0
    %v451 = vadd.f32 0.0, %v450
    %452 = vmatmul.f32.gmra.mxu0 %v132
    %v453 = vpop.f32.mrf.mxu0
    %v454 = vadd.f32 0.0, %v453
    %455 = vmatmul.f32.gmra.mxu0 %v135
    %v456 = vpop.f32.mrf.mxu0
    %v457 = vadd.f32 0.0, %v456
    %458 = vmatmul.f32.gmra.mxu0 %v138
    %v459 = vpop.f32.mrf.mxu0
    %v460 = vadd.f32 0.0, %v459
    %461 = vmatmul.f32.gmra.mxu0 %v141
    %v462 = vpop.f32.mrf.mxu0
    %v463 = vadd.f32 0.0, %v462
    %464 = vmatmul.f32.gmra.mxu0 %v144
    %v465 = vpop.f32.mrf.mxu0
    %v466 = vadd.f32 0.0, %v465
    %467 = vmatmul.f32.gmra.mxu0 %v147
    %v468 = vpop.f32.mrf.mxu0
    %v469 = vadd.f32 0.0, %v468
    %470 = vmatmul.f32.gmra.mxu0 %v150
    %v471 = vpop.f32.mrf.mxu0
    %v472 = vadd.f32 0.0, %v471
    %473 = vmatmul.f32.gmra.mxu0 %v153
    %v474 = vpop.f32.mrf.mxu0
    %v475 = vadd.f32 0.0, %v474
    %476 = vmatmul.f32.gmra.mxu0 %v156
    %v477 = vpop.f32.mrf.mxu0
    %v478 = vadd.f32 0.0, %v477
    %479 = vmatmul.f32.gmra.mxu0 %v159
    %v480 = vpop.f32.mrf.mxu0
    %v481 = vadd.f32 0.0, %v480
    %482 = vmatmul.f32.gmra.mxu0 %v162
    %v483 = vpop.f32.mrf.mxu0
    %v484 = vadd.f32 0.0, %v483
    %485 = vmatmul.f32.gmra.mxu0 %v165
    %v486 = vpop.f32.mrf.mxu0
    %v487 = vadd.f32 0.0, %v486
    %488 = vmatmul.f32.gmra.mxu0 %v168
    %v489 = vpop.f32.mrf.mxu0
    %v490 = vadd.f32 0.0, %v489
    %491 = vmatmul.f32.gmra.mxu0 %v171
    %v492 = vpop.f32.mrf.mxu0
    %v493 = vadd.f32 0.0, %v492
    %494 = vmatmul.f32.gmra.mxu0 %v174
    %v495 = vpop.f32.mrf.mxu0
    %v496 = vadd.f32 0.0, %v495
    %497 = vmatmul.f32.gmra.mxu0 %v177
    %v498 = vpop.f32.mrf.mxu0
    %v499 = vadd.f32 0.0, %v498
    %500 = vmatmul.f32.gmra.mxu0 %v180
    %v501 = vpop.f32.mrf.mxu0
    %v502 = vadd.f32 0.0, %v501
    %503 = vmatmul.f32.gmra.mxu0 %v183
    %v504 = vpop.f32.mrf.mxu0
    %v505 = vadd.f32 0.0, %v504
    %506 = vmatmul.f32.gmra.mxu0 %v186
    %v507 = vpop.f32.mrf.mxu0
    %v508 = vadd.f32 0.0, %v507
    %509 = vmatmul.f32.gmra.mxu0 %v189
    %v510 = vpop.f32.mrf.mxu0
    %v511 = vadd.f32 0.0, %v510
    %512 = vmatmul.f32.gmra.mxu0 %v192
    %v513 = vpop.f32.mrf.mxu0
    %v514 = vadd.f32 0.0, %v513
    %515 = vmatmul.f32.gmra.mxu0 %v195
    %v516 = vpop.f32.mrf.mxu0
    %v517 = vadd.f32 0.0, %v516
    %518 = vdwg.mxu0
    %v519 = vld [vmem:[%s3] sm:$0xff]
    %v520 = vld [vmem:[%s3 + $0x8] sm:$0xff]
    %v521 = vld [vmem:[%s3 + $0x10] sm:$0xff]
    %v522 = vld [vmem:[%s3 + $0x18] sm:$0xff]
    %v523 = vld [vmem:[%s3 + $0x20] sm:$0xff]
    %v524 = vld [vmem:[%s3 + $0x28] sm:$0xff]
    %v525 = vld [vmem:[%s3 + $0x30] sm:$0xff]
    %v526 = vld [vmem:[%s3 + $0x38] sm:$0xff]
    %v527 = vld [vmem:[%s3 + $0x40] sm:$0xff]
    %v528 = vld [vmem:[%s3 + $0x48] sm:$0xff]
    %v529 = vld [vmem:[%s3 + $0x50] sm:$0xff]
    %v530 = vld [vmem:[%s3 + $0x58] sm:$0xff]
    %v531 = vld [vmem:[%s3 + $0x60] sm:$0xff]
    %v532 = vld [vmem:[%s3 + $0x68] sm:$0xff]
    %v533 = vld [vmem:[%s3 + $0x70] sm:$0xff]
    %v534 = vld [vmem:[%s3 + $0x78] sm:$0xff]
    %v535 = vld [vmem:[%s3 + $0x80] sm:$0xff]
    %v536 = vld [vmem:[%s3 + $0x88] sm:$0xff]
    %v537 = vld [vmem:[%s3 + $0x90] sm:$0xff]
    %v538 = vld [vmem:[%s3 + $0x98] sm:$0xff]
    %v539 = vld [vmem:[%s3 + $0xa0] sm:$0xff]
    %v540 = vld [vmem:[%s3 + $0xa8] sm:$0xff]
    %v541 = vld [vmem:[%s3 + $0xb0] sm:$0xff]
    %v542 = vld [vmem:[%s3 + $0xb8] sm:$0xff]
    %v543 = vld [vmem:[%s3 + $0xc0] sm:$0xff]
    %v544 = vld [vmem:[%s3 + $0xc8] sm:$0xff]
    %v545 = vld [vmem:[%s3 + $0xd0] sm:$0xff]
    %v546 = vld [vmem:[%s3 + $0xd8] sm:$0xff]
    %v547 = vld [vmem:[%s3 + $0xe0] sm:$0xff]
    %v548 = vld [vmem:[%s3 + $0xe8] sm:$0xff]
    %v549 = vld [vmem:[%s3 + $0xf0] sm:$0xff]
    %v550 = vld [vmem:[%s3 + $0xf8] sm:$0xff]
    %v551 = vld [vmem:[%s4] sm:$0x3]
    %553 = vset.pattern.permute.xlu0 0
    %554 = vperm.xlu0 %553, %v519
    %v555 = vpop.permute.xlu0 %554
    %558 = vset.pattern.permute.xlu0 0
    %559 = vperm.xlu0 %558, %v520
    %v560 = vpop.permute.xlu0 %559
    %563 = vset.pattern.permute.xlu0 0
    %564 = vperm.xlu0 %563, %v521
    %v565 = vpop.permute.xlu0 %564
    %568 = vset.pattern.permute.xlu0 0
    %569 = vperm.xlu0 %568, %v522
    %v570 = vpop.permute.xlu0 %569
    %573 = vset.pattern.permute.xlu0 0
    %574 = vperm.xlu0 %573, %v523
    %v575 = vpop.permute.xlu0 %574
    %578 = vset.pattern.permute.xlu0 0
    %579 = vperm.xlu0 %578, %v524
    %v580 = vpop.permute.xlu0 %579
    %583 = vset.pattern.permute.xlu0 0
    %584 = vperm.xlu0 %583, %v525
    %v585 = vpop.permute.xlu0 %584
    %588 = vset.pattern.permute.xlu0 0
    %589 = vperm.xlu0 %588, %v526
    %v590 = vpop.permute.xlu0 %589
    %593 = vset.pattern.permute.xlu0 0
    %594 = vperm.xlu0 %593, %v527
    %v595 = vpop.permute.xlu0 %594
    %598 = vset.pattern.permute.xlu0 0
    %599 = vperm.xlu0 %598, %v528
    %v600 = vpop.permute.xlu0 %599
    %603 = vset.pattern.permute.xlu0 0
    %604 = vperm.xlu0 %603, %v529
    %v605 = vpop.permute.xlu0 %604
    %608 = vset.pattern.permute.xlu0 0
    %609 = vperm.xlu0 %608, %v530
    %v610 = vpop.permute.xlu0 %609
    %613 = vset.pattern.permute.xlu0 0
    %614 = vperm.xlu0 %613, %v531
    %v615 = vpop.permute.xlu0 %614
    %618 = vset.pattern.permute.xlu0 0
    %619 = vperm.xlu0 %618, %v532
    %v620 = vpop.permute.xlu0 %619
    %623 = vset.pattern.permute.xlu0 0
    %624 = vperm.xlu0 %623, %v533
    %v625 = vpop.permute.xlu0 %624
    %628 = vset.pattern.permute.xlu0 0
    %629 = vperm.xlu0 %628, %v534
    %v630 = vpop.permute.xlu0 %629
    %633 = vset.pattern.permute.xlu0 0
    %634 = vperm.xlu0 %633, %v535
    %v635 = vpop.permute.xlu0 %634
    %638 = vset.pattern.permute.xlu0 0
    %639 = vperm.xlu0 %638, %v536
    %v640 = vpop.permute.xlu0 %639
    %643 = vset.pattern.permute.xlu0 0
    %644 = vperm.xlu0 %643, %v537
    %v645 = vpop.permute.xlu0 %644
    %648 = vset.pattern.permute.xlu0 0
    %649 = vperm.xlu0 %648, %v538
    %v650 = vpop.permute.xlu0 %649
    %653 = vset.pattern.permute.xlu0 0
    %654 = vperm.xlu0 %653, %v539
    %v655 = vpop.permute.xlu0 %654
    %658 = vset.pattern.permute.xlu0 0
    %659 = vperm.xlu0 %658, %v540
    %v660 = vpop.permute.xlu0 %659
    %663 = vset.pattern.permute.xlu0 0
    %664 = vperm.xlu0 %663, %v541
    %v665 = vpop.permute.xlu0 %664
    %668 = vset.pattern.permute.xlu0 0
    %669 = vperm.xlu0 %668, %v542
    %v670 = vpop.permute.xlu0 %669
    %673 = vset.pattern.permute.xlu0 0
    %674 = vperm.xlu0 %673, %v543
    %v675 = vpop.permute.xlu0 %674
    %678 = vset.pattern.permute.xlu0 0
    %679 = vperm.xlu0 %678, %v544
    %v680 = vpop.permute.xlu0 %679
    %683 = vset.pattern.permute.xlu0 0
    %684 = vperm.xlu0 %683, %v545
    %v685 = vpop.permute.xlu0 %684
    %688 = vset.pattern.permute.xlu0 0
    %689 = vperm.xlu0 %688, %v546
    %v690 = vpop.permute.xlu0 %689
    %693 = vset.pattern.permute.xlu0 0
    %694 = vperm.xlu0 %693, %v547
    %v695 = vpop.permute.xlu0 %694
    %698 = vset.pattern.permute.xlu0 0
    %699 = vperm.xlu0 %698, %v548
    %v700 = vpop.permute.xlu0 %699
    %703 = vset.pattern.permute.xlu0 0
    %704 = vperm.xlu0 %703, %v549
    %v705 = vpop.permute.xlu0 %704
    %708 = vset.pattern.permute.xlu0 0
    %709 = vperm.xlu0 %708, %v550
    %v710 = vpop.permute.xlu0 %709
    %v713 = vperm.slane %v551, 0
    %v714 = vperm.slane %v551, 1
    %v717 = vadd.f32 %v555, %v713
    %v718 = vadd.f32 %v555, %v714
    %v719 = vadd.f32 %v560, %v713
    %v720 = vadd.f32 %v560, %v714
    %v721 = vadd.f32 %v565, %v713
    %v722 = vadd.f32 %v565, %v714
    %v723 = vadd.f32 %v570, %v713
    %v724 = vadd.f32 %v570, %v714
    %v725 = vadd.f32 %v575, %v713
    %v726 = vadd.f32 %v575, %v714
    %v727 = vadd.f32 %v580, %v713
    %v728 = vadd.f32 %v580, %v714
    %v729 = vadd.f32 %v585, %v713
    %v730 = vadd.f32 %v585, %v714
    %v731 = vadd.f32 %v590, %v713
    %v732 = vadd.f32 %v590, %v714
    %v733 = vadd.f32 %v595, %v713
    %v734 = vadd.f32 %v595, %v714
    %v735 = vadd.f32 %v600, %v713
    %v736 = vadd.f32 %v600, %v714
    %v737 = vadd.f32 %v605, %v713
    %v738 = vadd.f32 %v605, %v714
    %v739 = vadd.f32 %v610, %v713
    %v740 = vadd.f32 %v610, %v714
    %v741 = vadd.f32 %v615, %v713
    %v742 = vadd.f32 %v615, %v714
    %v743 = vadd.f32 %v620, %v713
    %v744 = vadd.f32 %v620, %v714
    %v745 = vadd.f32 %v625, %v713
    %v746 = vadd.f32 %v625, %v714
    %v747 = vadd.f32 %v630, %v713
    %v748 = vadd.f32 %v630, %v714
    %v749 = vadd.f32 %v635, %v713
    %v750 = vadd.f32 %v635, %v714
    %v751 = vadd.f32 %v640, %v713
    %v752 = vadd.f32 %v640, %v714
    %v753 = vadd.f32 %v645, %v713
    %v754 = vadd.f32 %v645, %v714
    %v755 = vadd.f32 %v650, %v713
    %v756 = vadd.f32 %v650, %v714
    %v757 = vadd.f32 %v655, %v713
    %v758 = vadd.f32 %v655, %v714
    %v759 = vadd.f32 %v660, %v713
    %v760 = vadd.f32 %v660, %v714
    %v761 = vadd.f32 %v665, %v713
    %v762 = vadd.f32 %v665, %v714
    %v763 = vadd.f32 %v670, %v713
    %v764 = vadd.f32 %v670, %v714
    %v765 = vadd.f32 %v675, %v713
    %v766 = vadd.f32 %v675, %v714
    %v767 = vadd.f32 %v680, %v713
    %v768 = vadd.f32 %v680, %v714
    %v769 = vadd.f32 %v685, %v713
    %v770 = vadd.f32 %v685, %v714
    %v771 = vadd.f32 %v690, %v713
    %v772 = vadd.f32 %v690, %v714
    %v773 = vadd.f32 %v695, %v713
    %v774 = vadd.f32 %v695, %v714
    %v775 = vadd.f32 %v700, %v713
    %v776 = vadd.f32 %v700, %v714
    %v777 = vadd.f32 %v705, %v713
    %v778 = vadd.f32 %v705, %v714
    %v779 = vadd.f32 %v710, %v713
    %v780 = vadd.f32 %v710, %v714
    %v781 = vstv %s34
    %v782 = vmul.f32 %v311, %v781
    %v783 = vmul.f32 %v424, %v781
    %v784 = vmul.f32 %v314, %v781
    %v785 = vmul.f32 %v427, %v781
    %v786 = vmul.f32 %v317, %v781
    %v787 = vmul.f32 %v430, %v781
    %v788 = vmul.f32 %v320, %v781
    %v789 = vmul.f32 %v433, %v781
    %v790 = vmul.f32 %v323, %v781
    %v791 = vmul.f32 %v436, %v781
    %v792 = vmul.f32 %v326, %v781
    %v793 = vmul.f32 %v439, %v781
    %v794 = vmul.f32 %v329, %v781
    %v795 = vmul.f32 %v442, %v781
    %v796 = vmul.f32 %v332, %v781
    %v797 = vmul.f32 %v445, %v781
    %v798 = vmul.f32 %v335, %v781
    %v799 = vmul.f32 %v448, %v781
    %v800 = vmul.f32 %v338, %v781
    %v801 = vmul.f32 %v451, %v781
    %v802 = vmul.f32 %v341, %v781
    %v803 = vmul.f32 %v454, %v781
    %v804 = vmul.f32 %v344, %v781
    %v805 = vmul.f32 %v457, %v781
    %v806 = vmul.f32 %v347, %v781
    %v807 = vmul.f32 %v460, %v781
    %v808 = vmul.f32 %v350, %v781
    %v809 = vmul.f32 %v463, %v781
    %v810 = vmul.f32 %v353, %v781
    %v811 = vmul.f32 %v466, %v781
    %v812 = vmul.f32 %v356, %v781
    %v813 = vmul.f32 %v469, %v781
    %v814 = vmul.f32 %v359, %v781
    %v815 = vmul.f32 %v472, %v781
    %v816 = vmul.f32 %v362, %v781
    %v817 = vmul.f32 %v475, %v781
    %v818 = vmul.f32 %v365, %v781
    %v819 = vmul.f32 %v478, %v781
    %v820 = vmul.f32 %v368, %v781
    %v821 = vmul.f32 %v481, %v781
    %v822 = vmul.f32 %v371, %v781
    %v823 = vmul.f32 %v484, %v781
    %v824 = vmul.f32 %v374, %v781
    %v825 = vmul.f32 %v487, %v781
    %v826 = vmul.f32 %v377, %v781
    %v827 = vmul.f32 %v490, %v781
    %v828 = vmul.f32 %v380, %v781
    %v829 = vmul.f32 %v493, %v781
    %v830 = vmul.f32 %v383, %v781
    %v831 = vmul.f32 %v496, %v781
    %v832 = vmul.f32 %v386, %v781
    %v833 = vmul.f32 %v499, %v781
    %v834 = vmul.f32 %v389, %v781
    %v835 = vmul.f32 %v502, %v781
    %v836 = vmul.f32 %v392, %v781
    %v837 = vmul.f32 %v505, %v781
    %v838 = vmul.f32 %v395, %v781
    %v839 = vmul.f32 %v508, %v781
    %v840 = vmul.f32 %v398, %v781
    %v841 = vmul.f32 %v511, %v781
    %v842 = vmul.f32 %v401, %v781
    %v843 = vmul.f32 %v514, %v781
    %v844 = vmul.f32 %v404, %v781
    %v845 = vmul.f32 %v517, %v781
    %v846 = vadd.f32 %v717, %v782
    %v847 = vadd.f32 %v718, %v783
    %v848 = vadd.f32 %v719, %v784
    %v849 = vadd.f32 %v720, %v785
    %v850 = vadd.f32 %v721, %v786
    %v851 = vadd.f32 %v722, %v787
    %v852 = vadd.f32 %v723, %v788
    %v853 = vadd.f32 %v724, %v789
    %v854 = vadd.f32 %v725, %v790
    %v855 = vadd.f32 %v726, %v791
    %v856 = vadd.f32 %v727, %v792
    %v857 = vadd.f32 %v728, %v793
    %v858 = vadd.f32 %v729, %v794
    %v859 = vadd.f32 %v730, %v795
    %v860 = vadd.f32 %v731, %v796
    %v861 = vadd.f32 %v732, %v797
    %v862 = vadd.f32 %v733, %v798
    %v863 = vadd.f32 %v734, %v799
    %v864 = vadd.f32 %v735, %v800
    %v865 = vadd.f32 %v736, %v801
    %v866 = vadd.f32 %v737, %v802
    %v867 = vadd.f32 %v738, %v803
    %v868 = vadd.f32 %v739, %v804
    %v869 = vadd.f32 %v740, %v805
    %v870 = vadd.f32 %v741, %v806
    %v871 = vadd.f32 %v742, %v807
    %v872 = vadd.f32 %v743, %v808
    %v873 = vadd.f32 %v744, %v809
    %v874 = vadd.f32 %v745, %v810
    %v875 = vadd.f32 %v746, %v811
    %v876 = vadd.f32 %v747, %v812
    %v877 = vadd.f32 %v748, %v813
    %v878 = vadd.f32 %v749, %v814
    %v879 = vadd.f32 %v750, %v815
    %v880 = vadd.f32 %v751, %v816
    %v881 = vadd.f32 %v752, %v817
    %v882 = vadd.f32 %v753, %v818
    %v883 = vadd.f32 %v754, %v819
    %v884 = vadd.f32 %v755, %v820
    %v885 = vadd.f32 %v756, %v821
    %v886 = vadd.f32 %v757, %v822
    %v887 = vadd.f32 %v758, %v823
    %v888 = vadd.f32 %v759, %v824
    %v889 = vadd.f32 %v760, %v825
    %v890 = vadd.f32 %v761, %v826
    %v891 = vadd.f32 %v762, %v827
    %v892 = vadd.f32 %v763, %v828
    %v893 = vadd.f32 %v764, %v829
    %v894 = vadd.f32 %v765, %v830
    %v895 = vadd.f32 %v766, %v831
    %v896 = vadd.f32 %v767, %v832
    %v897 = vadd.f32 %v768, %v833
    %v898 = vadd.f32 %v769, %v834
    %v899 = vadd.f32 %v770, %v835
    %v900 = vadd.f32 %v771, %v836
    %v901 = vadd.f32 %v772, %v837
    %v902 = vadd.f32 %v773, %v838
    %v903 = vadd.f32 %v774, %v839
    %v904 = vadd.f32 %v775, %v840
    %v905 = vadd.f32 %v776, %v841
    %v906 = vadd.f32 %v777, %v842
    %v907 = vadd.f32 %v778, %v843
    %v908 = vadd.f32 %v779, %v844
    %v909 = vadd.f32 %v780, %v845
    %v910 = vmin.f32 %v846, 0.0
    %v911 = vmin.f32 %v847, 0.0
    %v912 = vmin.f32 %v848, 0.0
    %v913 = vmin.f32 %v849, 0.0
    %v914 = vmin.f32 %v850, 0.0
    %v915 = vmin.f32 %v851, 0.0
    %v916 = vmin.f32 %v852, 0.0
    %v917 = vmin.f32 %v853, 0.0
    %v918 = vmin.f32 %v854, 0.0
    %v919 = vmin.f32 %v855, 0.0
    %v920 = vmin.f32 %v856, 0.0
    %v921 = vmin.f32 %v857, 0.0
    %v922 = vmin.f32 %v858, 0.0
    %v923 = vmin.f32 %v859, 0.0
    %v924 = vmin.f32 %v860, 0.0
    %v925 = vmin.f32 %v861, 0.0
    %v926 = vmin.f32 %v862, 0.0
    %v927 = vmin.f32 %v863, 0.0
    %v928 = vmin.f32 %v864, 0.0
    %v929 = vmin.f32 %v865, 0.0
    %v930 = vmin.f32 %v866, 0.0
    %v931 = vmin.f32 %v867, 0.0
    %v932 = vmin.f32 %v868, 0.0
    %v933 = vmin.f32 %v869, 0.0
    %v934 = vmin.f32 %v870, 0.0
    %v935 = vmin.f32 %v871, 0.0
    %v936 = vmin.f32 %v872, 0.0
    %v937 = vmin.f32 %v873, 0.0
    %v938 = vmin.f32 %v874, 0.0
    %v939 = vmin.f32 %v875, 0.0
    %v940 = vmin.f32 %v876, 0.0
    %v941 = vmin.f32 %v877, 0.0
    %v942 = vmin.f32 %v878, 0.0
    %v943 = vmin.f32 %v879, 0.0
    %v944 = vmin.f32 %v880, 0.0
    %v945 = vmin.f32 %v881, 0.0
    %v946 = vmin.f32 %v882, 0.0
    %v947 = vmin.f32 %v883, 0.0
    %v948 = vmin.f32 %v884, 0.0
    %v949 = vmin.f32 %v885, 0.0
    %v950 = vmin.f32 %v886, 0.0
    %v951 = vmin.f32 %v887, 0.0
    %v952 = vmin.f32 %v888, 0.0
    %v953 = vmin.f32 %v889, 0.0
    %v954 = vmin.f32 %v890, 0.0
    %v955 = vmin.f32 %v891, 0.0
    %v956 = vmin.f32 %v892, 0.0
    %v957 = vmin.f32 %v893, 0.0
    %v958 = vmin.f32 %v894, 0.0
    %v959 = vmin.f32 %v895, 0.0
    %v960 = vmin.f32 %v896, 0.0
    %v961 = vmin.f32 %v897, 0.0
    %v962 = vmin.f32 %v898, 0.0
    %v963 = vmin.f32 %v899, 0.0
    %v964 = vmin.f32 %v900, 0.0
    %v965 = vmin.f32 %v901, 0.0
    %v966 = vmin.f32 %v902, 0.0
    %v967 = vmin.f32 %v903, 0.0
    %v968 = vmin.f32 %v904, 0.0
    %v969 = vmin.f32 %v905, 0.0
    %v970 = vmin.f32 %v906, 0.0
    %v971 = vmin.f32 %v907, 0.0
    %v972 = vmin.f32 %v908, 0.0
    %v973 = vmin.f32 %v909, 0.0
    %v974 = vstv %s35
    %v975 = vmul.f32 %v974, %v311
    %v976 = vmul.f32 %v974, %v424
    %v977 = vmul.f32 %v974, %v314
    %v978 = vmul.f32 %v974, %v427
    %v979 = vmul.f32 %v974, %v317
    %v980 = vmul.f32 %v974, %v430
    %v981 = vmul.f32 %v974, %v320
    %v982 = vmul.f32 %v974, %v433
    %v983 = vmul.f32 %v974, %v323
    %v984 = vmul.f32 %v974, %v436
    %v985 = vmul.f32 %v974, %v326
    %v986 = vmul.f32 %v974, %v439
    %v987 = vmul.f32 %v974, %v329
    %v988 = vmul.f32 %v974, %v442
    %v989 = vmul.f32 %v974, %v332
    %v990 = vmul.f32 %v974, %v445
    %v991 = vmul.f32 %v974, %v335
    %v992 = vmul.f32 %v974, %v448
    %v993 = vmul.f32 %v974, %v338
    %v994 = vmul.f32 %v974, %v451
    %v995 = vmul.f32 %v974, %v341
    %v996 = vmul.f32 %v974, %v454
    %v997 = vmul.f32 %v974, %v344
    %v998 = vmul.f32 %v974, %v457
    %v999 = vmul.f32 %v974, %v347
    %v1000 = vmul.f32 %v974, %v460
    %v1001 = vmul.f32 %v974, %v350
    %v1002 = vmul.f32 %v974, %v463
    %v1003 = vmul.f32 %v974, %v353
    %v1004 = vmul.f32 %v974, %v466
    %v1005 = vmul.f32 %v974, %v356
    %v1006 = vmul.f32 %v974, %v469
    %v1007 = vmul.f32 %v974, %v359
    %v1008 = vmul.f32 %v974, %v472
    %v1009 = vmul.f32 %v974, %v362
    %v1010 = vmul.f32 %v974, %v475
    %v1011 = vmul.f32 %v974, %v365
    %v1012 = vmul.f32 %v974, %v478
    %v1013 = vmul.f32 %v974, %v368
    %v1014 = vmul.f32 %v974, %v481
    %v1015 = vmul.f32 %v974, %v371
    %v1016 = vmul.f32 %v974, %v484
    %v1017 = vmul.f32 %v974, %v374
    %v1018 = vmul.f32 %v974, %v487
    %v1019 = vmul.f32 %v974, %v377
    %v1020 = vmul.f32 %v974, %v490
    %v1021 = vmul.f32 %v974, %v380
    %v1022 = vmul.f32 %v974, %v493
    %v1023 = vmul.f32 %v974, %v383
    %v1024 = vmul.f32 %v974, %v496
    %v1025 = vmul.f32 %v974, %v386
    %v1026 = vmul.f32 %v974, %v499
    %v1027 = vmul.f32 %v974, %v389
    %v1028 = vmul.f32 %v974, %v502
    %v1029 = vmul.f32 %v974, %v392
    %v1030 = vmul.f32 %v974, %v505
    %v1031 = vmul.f32 %v974, %v395
    %v1032 = vmul.f32 %v974, %v508
    %v1033 = vmul.f32 %v974, %v398
    %v1034 = vmul.f32 %v974, %v511
    %v1035 = vmul.f32 %v974, %v401
    %v1036 = vmul.f32 %v974, %v514
    %v1037 = vmul.f32 %v974, %v404
    %v1038 = vmul.f32 %v974, %v517
    %v1039 = vmul.f32 %v910, 1.442695
    %v1040 = vpow.pop %v1039
    %v1041 = vmul.f32 %v911, 1.442695
    %v1042 = vpow.pop %v1041
    %v1043 = vmul.f32 %v912, 1.442695
    %v1044 = vpow.pop %v1043
    %v1045 = vmul.f32 %v913, 1.442695
    %v1046 = vpow.pop %v1045
    %v1047 = vmul.f32 %v914, 1.442695
    %v1048 = vpow.pop %v1047
    %v1049 = vmul.f32 %v915, 1.442695
    %v1050 = vpow.pop %v1049
    %v1051 = vmul.f32 %v916, 1.442695
    %v1052 = vpow.pop %v1051
    %v1053 = vmul.f32 %v917, 1.442695
    %v1054 = vpow.pop %v1053
    %v1055 = vmul.f32 %v918, 1.442695
    %v1056 = vpow.pop %v1055
    %v1057 = vmul.f32 %v919, 1.442695
    %v1058 = vpow.pop %v1057
    %v1059 = vmul.f32 %v920, 1.442695
    %v1060 = vpow.pop %v1059
    %v1061 = vmul.f32 %v921, 1.442695
    %v1062 = vpow.pop %v1061
    %v1063 = vmul.f32 %v922, 1.442695
    %v1064 = vpow.pop %v1063
    %v1065 = vmul.f32 %v923, 1.442695
    %v1066 = vpow.pop %v1065
    %v1067 = vmul.f32 %v924, 1.442695
    %v1068 = vpow.pop %v1067
    %v1069 = vmul.f32 %v925, 1.442695
    %v1070 = vpow.pop %v1069
    %v1071 = vmul.f32 %v926, 1.442695
    %v1072 = vpow.pop %v1071
    %v1073 = vmul.f32 %v927, 1.442695
    %v1074 = vpow.pop %v1073
    %v1075 = vmul.f32 %v928, 1.442695
    %v1076 = vpow.pop %v1075
    %v1077 = vmul.f32 %v929, 1.442695
    %v1078 = vpow.pop %v1077
    %v1079 = vmul.f32 %v930, 1.442695
    %v1080 = vpow.pop %v1079
    %v1081 = vmul.f32 %v931, 1.442695
    %v1082 = vpow.pop %v1081
    %v1083 = vmul.f32 %v932, 1.442695
    %v1084 = vpow.pop %v1083
    %v1085 = vmul.f32 %v933, 1.442695
    %v1086 = vpow.pop %v1085
    %v1087 = vmul.f32 %v934, 1.442695
    %v1088 = vpow.pop %v1087
    %v1089 = vmul.f32 %v935, 1.442695
    %v1090 = vpow.pop %v1089
    %v1091 = vmul.f32 %v936, 1.442695
    %v1092 = vpow.pop %v1091
    %v1093 = vmul.f32 %v937, 1.442695
    %v1094 = vpow.pop %v1093
    %v1095 = vmul.f32 %v938, 1.442695
    %v1096 = vpow.pop %v1095
    %v1097 = vmul.f32 %v939, 1.442695
    %v1098 = vpow.pop %v1097
    %v1099 = vmul.f32 %v940, 1.442695
    %v1100 = vpow.pop %v1099
    %v1101 = vmul.f32 %v941, 1.442695
    %v1102 = vpow.pop %v1101
    %v1103 = vmul.f32 %v942, 1.442695
    %v1104 = vpow.pop %v1103
    %v1105 = vmul.f32 %v943, 1.442695
    %v1106 = vpow.pop %v1105
    %v1107 = vmul.f32 %v944, 1.442695
    %v1108 = vpow.pop %v1107
    %v1109 = vmul.f32 %v945, 1.442695
    %v1110 = vpow.pop %v1109
    %v1111 = vmul.f32 %v946, 1.442695
    %v1112 = vpow.pop %v1111
    %v1113 = vmul.f32 %v947, 1.442695
    %v1114 = vpow.pop %v1113
    %v1115 = vmul.f32 %v948, 1.442695
    %v1116 = vpow.pop %v1115
    %v1117 = vmul.f32 %v949, 1.442695
    %v1118 = vpow.pop %v1117
    %v1119 = vmul.f32 %v950, 1.442695
    %v1120 = vpow.pop %v1119
    %v1121 = vmul.f32 %v951, 1.442695
    %v1122 = vpow.pop %v1121
    %v1123 = vmul.f32 %v952, 1.442695
    %v1124 = vpow.pop %v1123
    %v1125 = vmul.f32 %v953, 1.442695
    %v1126 = vpow.pop %v1125
    %v1127 = vmul.f32 %v954, 1.442695
    %v1128 = vpow.pop %v1127
    %v1129 = vmul.f32 %v955, 1.442695
    %v1130 = vpow.pop %v1129
    %v1131 = vmul.f32 %v956, 1.442695
    %v1132 = vpow.pop %v1131
    %v1133 = vmul.f32 %v957, 1.442695
    %v1134 = vpow.pop %v1133
    %v1135 = vmul.f32 %v958, 1.442695
    %v1136 = vpow.pop %v1135
    %v1137 = vmul.f32 %v959, 1.442695
    %v1138 = vpow.pop %v1137
    %v1139 = vmul.f32 %v960, 1.442695
    %v1140 = vpow.pop %v1139
    %v1141 = vmul.f32 %v961, 1.442695
    %v1142 = vpow.pop %v1141
    %v1143 = vmul.f32 %v962, 1.442695
    %v1144 = vpow.pop %v1143
    %v1145 = vmul.f32 %v963, 1.442695
    %v1146 = vpow.pop %v1145
    %v1147 = vmul.f32 %v964, 1.442695
    %v1148 = vpow.pop %v1147
    %v1149 = vmul.f32 %v965, 1.442695
    %v1150 = vpow.pop %v1149
    %v1151 = vmul.f32 %v966, 1.442695
    %v1152 = vpow.pop %v1151
    %v1153 = vmul.f32 %v967, 1.442695
    %v1154 = vpow.pop %v1153
    %v1155 = vmul.f32 %v968, 1.442695
    %v1156 = vpow.pop %v1155
    %v1157 = vmul.f32 %v969, 1.442695
    %v1158 = vpow.pop %v1157
    %v1159 = vmul.f32 %v970, 1.442695
    %v1160 = vpow.pop %v1159
    %v1161 = vmul.f32 %v971, 1.442695
    %v1162 = vpow.pop %v1161
    %v1163 = vmul.f32 %v972, 1.442695
    %v1164 = vpow.pop %v1163
    %v1165 = vmul.f32 %v973, 1.442695
    %v1166 = vpow.pop %v1165
    %v1167 = vmul.f32 %v975, %v1040
    %v1168 = vmul.f32 %v976, %v1042
    %v1169 = vmul.f32 %v977, %v1044
    %v1170 = vmul.f32 %v978, %v1046
    %v1171 = vmul.f32 %v979, %v1048
    %v1172 = vmul.f32 %v980, %v1050
    %v1173 = vmul.f32 %v981, %v1052
    %v1174 = vmul.f32 %v982, %v1054
    %v1175 = vmul.f32 %v983, %v1056
    %v1176 = vmul.f32 %v984, %v1058
    %v1177 = vmul.f32 %v985, %v1060
    %v1178 = vmul.f32 %v986, %v1062
    %v1179 = vmul.f32 %v987, %v1064
    %v1180 = vmul.f32 %v988, %v1066
    %v1181 = vmul.f32 %v989, %v1068
    %v1182 = vmul.f32 %v990, %v1070
    %v1183 = vmul.f32 %v991, %v1072
    %v1184 = vmul.f32 %v992, %v1074
    %v1185 = vmul.f32 %v993, %v1076
    %v1186 = vmul.f32 %v994, %v1078
    %v1187 = vmul.f32 %v995, %v1080
    %v1188 = vmul.f32 %v996, %v1082
    %v1189 = vmul.f32 %v997, %v1084
    %v1190 = vmul.f32 %v998, %v1086
    %v1191 = vmul.f32 %v999, %v1088
    %v1192 = vmul.f32 %v1000, %v1090
    %v1193 = vmul.f32 %v1001, %v1092
    %v1194 = vmul.f32 %v1002, %v1094
    %v1195 = vmul.f32 %v1003, %v1096
    %v1196 = vmul.f32 %v1004, %v1098
    %v1197 = vmul.f32 %v1005, %v1100
    %v1198 = vmul.f32 %v1006, %v1102
    %v1199 = vmul.f32 %v1007, %v1104
    %v1200 = vmul.f32 %v1008, %v1106
    %v1201 = vmul.f32 %v1009, %v1108
    %v1202 = vmul.f32 %v1010, %v1110
    %v1203 = vmul.f32 %v1011, %v1112
    %v1204 = vmul.f32 %v1012, %v1114
    %v1205 = vmul.f32 %v1013, %v1116
    %v1206 = vmul.f32 %v1014, %v1118
    %v1207 = vmul.f32 %v1015, %v1120
    %v1208 = vmul.f32 %v1016, %v1122
    %v1209 = vmul.f32 %v1017, %v1124
    %v1210 = vmul.f32 %v1018, %v1126
    %v1211 = vmul.f32 %v1019, %v1128
    %v1212 = vmul.f32 %v1020, %v1130
    %v1213 = vmul.f32 %v1021, %v1132
    %v1214 = vmul.f32 %v1022, %v1134
    %v1215 = vmul.f32 %v1023, %v1136
    %v1216 = vmul.f32 %v1024, %v1138
    %v1217 = vmul.f32 %v1025, %v1140
    %v1218 = vmul.f32 %v1026, %v1142
    %v1219 = vmul.f32 %v1027, %v1144
    %v1220 = vmul.f32 %v1028, %v1146
    %v1221 = vmul.f32 %v1029, %v1148
    %v1222 = vmul.f32 %v1030, %v1150
    %v1223 = vmul.f32 %v1031, %v1152
    %v1224 = vmul.f32 %v1032, %v1154
    %v1225 = vmul.f32 %v1033, %v1156
    %v1226 = vmul.f32 %v1034, %v1158
    %v1227 = vmul.f32 %v1035, %v1160
    %v1228 = vmul.f32 %v1036, %v1162
    %v1229 = vmul.f32 %v1037, %v1164
    %v1230 = vmul.f32 %v1038, %v1166
    %1231 = vst [vmem:[#allocation5] sm:$0xff] %v1167
    %1232 = vst [vmem:[#allocation5 + $0x8] sm:$0xff] %v1168
    %1233 = vst [vmem:[#allocation5 + $0x10] sm:$0xff] %v1169
    %1234 = vst [vmem:[#allocation5 + $0x18] sm:$0xff] %v1170
    %1235 = vst [vmem:[#allocation5 + $0x20] sm:$0xff] %v1171
    %1236 = vst [vmem:[#allocation5 + $0x28] sm:$0xff] %v1172
    %1237 = vst [vmem:[#allocation5 + $0x30] sm:$0xff] %v1173
    %1238 = vst [vmem:[#allocation5 + $0x38] sm:$0xff] %v1174
    %1239 = vst [vmem:[#allocation5 + $0x40] sm:$0xff] %v1175
    %1240 = vst [vmem:[#allocation5 + $0x48] sm:$0xff] %v1176
    %1241 = vst [vmem:[#allocation5 + $0x50] sm:$0xff] %v1177
    %1242 = vst [vmem:[#allocation5 + $0x58] sm:$0xff] %v1178
    %1243 = vst [vmem:[#allocation5 + $0x60] sm:$0xff] %v1179
    %1244 = vst [vmem:[#allocation5 + $0x68] sm:$0xff] %v1180
    %1245 = vst [vmem:[#allocation5 + $0x70] sm:$0xff] %v1181
    %1246 = vst [vmem:[#allocation5 + $0x78] sm:$0xff] %v1182
    %1247 = vst [vmem:[#allocation5 + $0x80] sm:$0xff] %v1183
    %1248 = vst [vmem:[#allocation5 + $0x88] sm:$0xff] %v1184
    %1249 = vst [vmem:[#allocation5 + $0x90] sm:$0xff] %v1185
    %1250 = vst [vmem:[#allocation5 + $0x98] sm:$0xff] %v1186
    %1251 = vst [vmem:[#allocation5 + $0xa0] sm:$0xff] %v1187
    %1252 = vst [vmem:[#allocation5 + $0xa8] sm:$0xff] %v1188
    %1253 = vst [vmem:[#allocation5 + $0xb0] sm:$0xff] %v1189
    %1254 = vst [vmem:[#allocation5 + $0xb8] sm:$0xff] %v1190
    %1255 = vst [vmem:[#allocation5 + $0xc0] sm:$0xff] %v1191
    %1256 = vst [vmem:[#allocation5 + $0xc8] sm:$0xff] %v1192
    %1257 = vst [vmem:[#allocation5 + $0xd0] sm:$0xff] %v1193
    %1258 = vst [vmem:[#allocation5 + $0xd8] sm:$0xff] %v1194
    %1259 = vst [vmem:[#allocation5 + $0xe0] sm:$0xff] %v1195
    %1260 = vst [vmem:[#allocation5 + $0xe8] sm:$0xff] %v1196
    %1261 = vst [vmem:[#allocation5 + $0xf0] sm:$0xff] %v1197
    %1262 = vst [vmem:[#allocation5 + $0xf8] sm:$0xff] %v1198
    %1263 = vst [vmem:[#allocation5 + $0x100] sm:$0xff] %v1199
    %1264 = vst [vmem:[#allocation5 + $0x108] sm:$0xff] %v1200
    %1265 = vst [vmem:[#allocation5 + $0x110] sm:$0xff] %v1201
    %1266 = vst [vmem:[#allocation5 + $0x118] sm:$0xff] %v1202
    %1267 = vst [vmem:[#allocation5 + $0x120] sm:$0xff] %v1203
    %1268 = vst [vmem:[#allocation5 + $0x128] sm:$0xff] %v1204
    %1269 = vst [vmem:[#allocation5 + $0x130] sm:$0xff] %v1205
    %1270 = vst [vmem:[#allocation5 + $0x138] sm:$0xff] %v1206
    %1271 = vst [vmem:[#allocation5 + $0x140] sm:$0xff] %v1207
    %1272 = vst [vmem:[#allocation5 + $0x148] sm:$0xff] %v1208
    %1273 = vst [vmem:[#allocation5 + $0x150] sm:$0xff] %v1209
    %1274 = vst [vmem:[#allocation5 + $0x158] sm:$0xff] %v1210
    %1275 = vst [vmem:[#allocation5 + $0x160] sm:$0xff] %v1211
    %1276 = vst [vmem:[#allocation5 + $0x168] sm:$0xff] %v1212
    %1277 = vst [vmem:[#allocation5 + $0x170] sm:$0xff] %v1213
    %1278 = vst [vmem:[#allocation5 + $0x178] sm:$0xff] %v1214
    %1279 = vst [vmem:[#allocation5 + $0x180] sm:$0xff] %v1215
    %1280 = vst [vmem:[#allocation5 + $0x188] sm:$0xff] %v1216
    %1281 = vst [vmem:[#allocation5 + $0x190] sm:$0xff] %v1217
    %1282 = vst [vmem:[#allocation5 + $0x198] sm:$0xff] %v1218
    %1283 = vst [vmem:[#allocation5 + $0x1a0] sm:$0xff] %v1219
    %1284 = vst [vmem:[#allocation5 + $0x1a8] sm:$0xff] %v1220
    %1285 = vst [vmem:[#allocation5 + $0x1b0] sm:$0xff] %v1221
    %1286 = vst [vmem:[#allocation5 + $0x1b8] sm:$0xff] %v1222
    %1287 = vst [vmem:[#allocation5 + $0x1c0] sm:$0xff] %v1223
    %1288 = vst [vmem:[#allocation5 + $0x1c8] sm:$0xff] %v1224
    %1289 = vst [vmem:[#allocation5 + $0x1d0] sm:$0xff] %v1225
    %1290 = vst [vmem:[#allocation5 + $0x1d8] sm:$0xff] %v1226
    %1291 = vst [vmem:[#allocation5 + $0x1e0] sm:$0xff] %v1227
    %1292 = vst [vmem:[#allocation5 + $0x1e8] sm:$0xff] %v1228
    %1293 = vst [vmem:[#allocation5 + $0x1f0] sm:$0xff] %v1229
    %1294 = vst [vmem:[#allocation5 + $0x1f8] sm:$0xff] %v1230
    // Predicated region
    $region26: #{tpu_custom_call.1} parent=1 // pred_check
      _
    $region27: #{tpu_custom_call.1} parent=1 // pred_check_branch
      %1296 = sbr.rel (0) target = $region29
    $region28: #{tpu_custom_call.1} parent=1 // pred_region
      %1298 = vsyncadd [#allocation3], 0
      %s1299 = sshll.u32 [#allocation5], 4
      %s1300 = int_to_ptr.vmem [resolvable:$true] %s1299
      %s1301 = sshll.u32 %s5, 4
      %s1302 = int_to_ptr.hbm [resolvable:$true] %s1301
      %1307 = dma.vmem_to_hbm [thread:$0]  %s1300, 8192, %s1302, [#allocation3], 256, 256, 16
    $region29: #{tpu_custom_call.1} parent=1 // pred_fallthru
      _
    // Predicated region
    $region30: #{tpu_custom_call.1} parent=1 // pred_check
      _
    $region31: #{tpu_custom_call.1} parent=1 // pred_check_branch
      %1309 = sbr.rel (0) target = $region33
    $region32: #{tpu_custom_call.1} parent=1 // pred_region
      %1311 = dma.done [#allocation3], 8192
    $region33: #{tpu_custom_call.1} parent=1 // pred_fallthru
      _
    %1312 = vsyncpa [#allocation3], 1
    %1313 = vsyncpa [#allocation4], 1

</llo_original>
